<compile_context>
chip_gen: v7x
topology: tpu7x:2x2x1
jax: 0.10.0
libtpu: 0.0.40
codegen_flags: <defaults>
</compile_context>

<pallas_src>
import jax
import jax.numpy as jnp
from jax.experimental import pallas as pl
from jax.experimental.pallas import tpu as pltpu


def _mlp_kernel(xT_ref,
                w1_ref, b1_ref,
                w2_ref, b2_ref,
                w3_ref, b3_ref,
                w4_ref, b4_ref,
                out_ref):
    """Whole 4-layer MLP for one batch tile; batch on the lane axis."""
    x = xT_ref[...]                                              # (data_dim, TM) bf16

    # Layer 1: (hidden, data_dim) @ (data_dim, TM) -> (hidden, TM), f32 accum.
    h = jnp.dot(w1_ref[...], x, preferred_element_type=jnp.float32)
    h = jnp.maximum(h + b1_ref[...], 0.0)                        # bias (hidden,1) bcast on lanes

    # Layer 2.
    h = jnp.dot(w2_ref[...], h.astype(w2_ref.dtype),
                preferred_element_type=jnp.float32)
    h = jnp.maximum(h + b2_ref[...], 0.0)

    # Layer 3.
    h = jnp.dot(w3_ref[...], h.astype(w3_ref.dtype),
                preferred_element_type=jnp.float32)
    h = jnp.maximum(h + b3_ref[...], 0.0)

    # Layer 4 (hidden -> 1): VPU multiply + sublane reduce (no N=1 MXU matmul).
    w4 = w4_ref[...]                                             # (hidden, 1) f32
    out = jnp.sum(h * w4, axis=0, keepdims=True) + b4_ref[...]   # (1, TM)
    out_ref[...] = out.astype(out_ref.dtype)


def discriminator_forward(x, params, *, tile_b=256):
    """x: (B, data_dim) float32.  Returns (B,) float32 — matches .view(-1)."""
    (w1, b1), (w2, b2), (w3, b3), (w4, b4) = params
    B, data_dim = x.shape
    hidden = w1.shape[0]

    # Batch on lanes: transpose x and pad B up to a multiple of the lane tile.
    b_pad = pl.cdiv(B, tile_b) * tile_b
    xT = jnp.pad(x.astype(w1.dtype).T, ((0, 0), (0, b_pad - B)))  # (data_dim, b_pad)

    grid = (b_pad // tile_b,)
    const2d = lambda a: pl.BlockSpec(a.shape, lambda i: (0, 0))   # weight/bias resident in VMEM

    flops = 2 * b_pad * (data_dim * hidden + 2 * hidden * hidden + hidden)
    bytes_accessed = (xT.size * xT.dtype.itemsize
                      + sum(a.size * a.dtype.itemsize
                            for a in (w1, b1, w2, b2, w3, b3, w4, b4))
                      + b_pad * 4)

    out = pl.pallas_call(
        _mlp_kernel,
        out_shape=jax.ShapeDtypeStruct((1, b_pad), jnp.float32),
        grid=grid,
        in_specs=[pl.BlockSpec((data_dim, tile_b), lambda i: (0, i)),
                  const2d(w1), const2d(b1),
                  const2d(w2), const2d(b2),
                  const2d(w3), const2d(b3),
                  const2d(w4), const2d(b4)],
        out_specs=pl.BlockSpec((1, tile_b), lambda i: (0, i)),
        compiler_params=pltpu.CompilerParams(
            dimension_semantics=("parallel",)),
        cost_estimate=pl.CostEstimate(
            flops=flops, transcendentals=0, bytes_accessed=bytes_accessed),
    )(xT, w1, b1, w2, b2, w3, b3, w4, b4)

    return out[0, :B]                                             # (B,)


def init_params(key, data_dim, hidden_dim):
    """Kaiming-normal weights (zero bias), like weights_init.

    Storage layout (kernel-friendly):
      w1..w3: torch-native (out_features, in_features), bf16 (MXU path).
      w4:     (hidden, 1) f32 column (used on the VPU, not the MXU).
      b1..b3: (hidden, 1) f32; b4: (1, 1) f32.
    """
    params = []
    dims = [(hidden_dim, data_dim), (hidden_dim, hidden_dim),
            (hidden_dim, hidden_dim), (1, hidden_dim)]
    for li, (fan_out, fan_in) in enumerate(dims):
        key, sub = jax.random.split(key)
        std = jnp.sqrt(2.0 / fan_in)                 # kaiming_normal_ default (fan_in, relu gain)
        w = jax.random.normal(sub, (fan_out, fan_in), dtype=jnp.float32) * std
        if li < 3:
            w = w.astype(jnp.bfloat16)               # MXU bf16 path, f32 accumulate
            b = jnp.zeros((fan_out, 1), dtype=jnp.float32)
        else:
            w = w.T.astype(jnp.float32)              # (hidden, 1) column for VPU reduce
            b = jnp.zeros((1, 1), dtype=jnp.float32)
        params.append((w, b))
    return params


def reference_forward(x, params):
    """Pure-JAX reference with the same bf16 storage / f32 accumulation."""
    (w1, b1), (w2, b2), (w3, b3), (w4, b4) = params
    f32 = jnp.float32
    h = x.astype(jnp.bfloat16).astype(f32)
    h = jnp.maximum(h @ w1.astype(f32).T + b1.reshape(1, -1), 0.0)
    h = jnp.maximum(h.astype(jnp.bfloat16).astype(f32) @ w2.astype(f32).T
                    + b2.reshape(1, -1), 0.0)
    h = jnp.maximum(h.astype(jnp.bfloat16).astype(f32) @ w3.astype(f32).T
                    + b3.reshape(1, -1), 0.0)
    out = h @ w4 + b4.reshape(1, -1)                 # w4 is (hidden, 1) f32
    return out.reshape(-1)


if __name__ == "__main__":
    key = jax.random.PRNGKey(0)
    data_dim, hidden_dim, batch = 16, 32, 300        # batch pads to 512 -> 2 grid steps

    k_x, k_p = jax.random.split(key)
    x = jax.random.normal(k_x, (batch, data_dim), dtype=jnp.float32)
    params = init_params(k_p, data_dim, hidden_dim)

    y = jax.block_until_ready(discriminator_forward(x, params, tile_b=256))

    y_ref = reference_forward(x, params)
    assert y.shape == (batch,), y.shape
    assert jnp.allclose(y, y_ref, atol=1e-3, rtol=1e-3), (y[:8], y_ref[:8])

    print("KERNEL_OK")
</pallas_src>

<mosaic_0001>
module attributes {stable_mosaic.version = 11 : i64} {
  func.func @_mlp_kernel(%arg0: i32, %arg1: memref<16x256xbf16, #tpu.memory_space<vmem>>, %arg2: memref<32x16xbf16, #tpu.memory_space<vmem>>, %arg3: memref<32x1xf32, #tpu.memory_space<vmem>>, %arg4: memref<32x32xbf16, #tpu.memory_space<vmem>>, %arg5: memref<32x1xf32, #tpu.memory_space<vmem>>, %arg6: memref<32x32xbf16, #tpu.memory_space<vmem>>, %arg7: memref<32x1xf32, #tpu.memory_space<vmem>>, %arg8: memref<32x1xf32, #tpu.memory_space<vmem>>, %arg9: memref<1x1xf32, #tpu.memory_space<vmem>>, %arg10: memref<1x256xf32, #tpu.memory_space<vmem>>) attributes {dimension_semantics = [#tpu.dimension_semantics<parallel>], iteration_bounds = array<i64: 2>, scalar_prefetch = 0 : i64, scratch_operands = 0 : i64, tpu.core_type = #tpu.core_type<tc>, window_params = [{transform_indices = @transform_0, window_bounds = array<i64: 16, 256>}, {pipeline_mode = #tpu.pipeline_mode<synchronous>, transform_indices = @transform_1, window_bounds = array<i64: 32, 16>}, {pipeline_mode = #tpu.pipeline_mode<synchronous>, transform_indices = @transform_2, window_bounds = array<i64: 32, 1>}, {pipeline_mode = #tpu.pipeline_mode<synchronous>, transform_indices = @transform_3, window_bounds = array<i64: 32, 32>}, {pipeline_mode = #tpu.pipeline_mode<synchronous>, transform_indices = @transform_4, window_bounds = array<i64: 32, 1>}, {pipeline_mode = #tpu.pipeline_mode<synchronous>, transform_indices = @transform_5, window_bounds = array<i64: 32, 32>}, {pipeline_mode = #tpu.pipeline_mode<synchronous>, transform_indices = @transform_6, window_bounds = array<i64: 32, 1>}, {pipeline_mode = #tpu.pipeline_mode<synchronous>, transform_indices = @transform_7, window_bounds = array<i64: 32, 1>}, {pipeline_mode = #tpu.pipeline_mode<synchronous>, transform_indices = @transform_8, window_bounds = array<i64: 1, 1>}, {transform_indices = @transform_9, window_bounds = array<i64: 1, 256>}]} {
    %c0 = arith.constant 0 : index
    %c0_0 = arith.constant 0 : index
    %0 = vector.load %arg1[%c0, %c0_0] : memref<16x256xbf16, #tpu.memory_space<vmem>>, vector<16x256xbf16>
    %c0_1 = arith.constant 0 : index
    %c0_2 = arith.constant 0 : index
    %1 = vector.load %arg2[%c0_1, %c0_2] : memref<32x16xbf16, #tpu.memory_space<vmem>>, vector<32x16xbf16>
    %cst = arith.constant dense<0.000000e+00> : vector<32x256xf32>
    %2 = tpu.matmul %1, %0, %cst {dimension_numbers = #tpu.dot_dimension_numbers<[1], [0], [0], [1], [0, 0, 1, 1], [], []>} : vector<32x16xbf16>, vector<16x256xbf16>, vector<32x256xf32> -> vector<32x256xf32>
    %c0_3 = arith.constant 0 : index
    %c0_4 = arith.constant 0 : index
    %3 = vector.load %arg3[%c0_3, %c0_4] : memref<32x1xf32, #tpu.memory_space<vmem>>, vector<32x1xf32>
    %4 = vector.broadcast %3 : vector<32x1xf32> to vector<32x256xf32>
    %5 = arith.addf %2, %4 : vector<32x256xf32>
    %cst_5 = arith.constant 0.000000e+00 : f32
    %6 = vector.broadcast %cst_5 : f32 to vector<32x256xf32>
    %7 = arith.maximumf %5, %6 : vector<32x256xf32>
    %c0_6 = arith.constant 0 : index
    %c0_7 = arith.constant 0 : index
    %8 = vector.load %arg4[%c0_6, %c0_7] : memref<32x32xbf16, #tpu.memory_space<vmem>>, vector<32x32xbf16>
    %9 = arith.truncf %7 : vector<32x256xf32> to vector<32x256xbf16>
    %cst_8 = arith.constant dense<0.000000e+00> : vector<32x256xf32>
    %10 = tpu.matmul %8, %9, %cst_8 {dimension_numbers = #tpu.dot_dimension_numbers<[1], [0], [0], [1], [0, 0, 1, 1], [], []>} : vector<32x32xbf16>, vector<32x256xbf16>, vector<32x256xf32> -> vector<32x256xf32>
    %c0_9 = arith.constant 0 : index
    %c0_10 = arith.constant 0 : index
    %11 = vector.load %arg5[%c0_9, %c0_10] : memref<32x1xf32, #tpu.memory_space<vmem>>, vector<32x1xf32>
    %12 = vector.broadcast %11 : vector<32x1xf32> to vector<32x256xf32>
    %13 = arith.addf %10, %12 : vector<32x256xf32>
    %cst_11 = arith.constant 0.000000e+00 : f32
    %14 = vector.broadcast %cst_11 : f32 to vector<32x256xf32>
    %15 = arith.maximumf %13, %14 : vector<32x256xf32>
    %c0_12 = arith.constant 0 : index
    %c0_13 = arith.constant 0 : index
    %16 = vector.load %arg6[%c0_12, %c0_13] : memref<32x32xbf16, #tpu.memory_space<vmem>>, vector<32x32xbf16>
    %17 = arith.truncf %15 : vector<32x256xf32> to vector<32x256xbf16>
    %cst_14 = arith.constant dense<0.000000e+00> : vector<32x256xf32>
    %18 = tpu.matmul %16, %17, %cst_14 {dimension_numbers = #tpu.dot_dimension_numbers<[1], [0], [0], [1], [0, 0, 1, 1], [], []>} : vector<32x32xbf16>, vector<32x256xbf16>, vector<32x256xf32> -> vector<32x256xf32>
    %c0_15 = arith.constant 0 : index
    %c0_16 = arith.constant 0 : index
    %19 = vector.load %arg7[%c0_15, %c0_16] : memref<32x1xf32, #tpu.memory_space<vmem>>, vector<32x1xf32>
    %20 = vector.broadcast %19 : vector<32x1xf32> to vector<32x256xf32>
    %21 = arith.addf %18, %20 : vector<32x256xf32>
    %cst_17 = arith.constant 0.000000e+00 : f32
    %22 = vector.broadcast %cst_17 : f32 to vector<32x256xf32>
    %23 = arith.maximumf %21, %22 : vector<32x256xf32>
    %c0_18 = arith.constant 0 : index
    %c0_19 = arith.constant 0 : index
    %24 = vector.load %arg8[%c0_18, %c0_19] : memref<32x1xf32, #tpu.memory_space<vmem>>, vector<32x1xf32>
    %25 = vector.broadcast %24 : vector<32x1xf32> to vector<32x256xf32>
    %26 = arith.mulf %23, %25 : vector<32x256xf32>
    %cst_20 = arith.constant dense<0.000000e+00> : vector<256xf32>
    %27 = vector.multi_reduction <add>, %26, %cst_20 [0] : vector<32x256xf32> to vector<256xf32>
    %28 = vector.shape_cast %27 : vector<256xf32> to vector<1x256xf32>
    %c0_21 = arith.constant 0 : index
    %c0_22 = arith.constant 0 : index
    %29 = vector.load %arg9[%c0_21, %c0_22] : memref<1x1xf32, #tpu.memory_space<vmem>>, vector<1x1xf32>
    %30 = vector.broadcast %29 : vector<1x1xf32> to vector<1x256xf32>
    %31 = arith.addf %28, %30 : vector<1x256xf32>
    %c0_23 = arith.constant 0 : index
    %c0_24 = arith.constant 0 : index
    %32 = vector.load %arg10[%c0_23, %c0_24] : memref<1x256xf32, #tpu.memory_space<vmem>>, vector<1x256xf32>
    tpu.vector_store %arg10[%c0_23, %c0_24], %31 {strides = array<i32>} : memref<1x256xf32, #tpu.memory_space<vmem>>, vector<1x256xf32>,
    return
  }
  func.func @transform_0(%arg0: i32) -> (i32, i32) {
    %c0_i32 = arith.constant 0 : i32
    %c0_i32_0 = arith.constant 0 : i32
    return %c0_i32, %arg0 : i32, i32
  }
  func.func @transform_1(%arg0: i32) -> (i32, i32) {
    %c0_i32 = arith.constant 0 : i32
    %c0_i32_0 = arith.constant 0 : i32
    %c0_i32_1 = arith.constant 0 : i32
    return %c0_i32, %c0_i32_0 : i32, i32
  }
  func.func @transform_2(%arg0: i32) -> (i32, i32) {
    %c0_i32 = arith.constant 0 : i32
    %c0_i32_0 = arith.constant 0 : i32
    %c0_i32_1 = arith.constant 0 : i32
    return %c0_i32, %c0_i32_0 : i32, i32
  }
  func.func @transform_3(%arg0: i32) -> (i32, i32) {
    %c0_i32 = arith.constant 0 : i32
    %c0_i32_0 = arith.constant 0 : i32
    %c0_i32_1 = arith.constant 0 : i32
    return %c0_i32, %c0_i32_0 : i32, i32
  }
  func.func @transform_4(%arg0: i32) -> (i32, i32) {
    %c0_i32 = arith.constant 0 : i32
    %c0_i32_0 = arith.constant 0 : i32
    %c0_i32_1 = arith.constant 0 : i32
    return %c0_i32, %c0_i32_0 : i32, i32
  }
  func.func @transform_5(%arg0: i32) -> (i32, i32) {
    %c0_i32 = arith.constant 0 : i32
    %c0_i32_0 = arith.constant 0 : i32
    %c0_i32_1 = arith.constant 0 : i32
    return %c0_i32, %c0_i32_0 : i32, i32
  }
  func.func @transform_6(%arg0: i32) -> (i32, i32) {
    %c0_i32 = arith.constant 0 : i32
    %c0_i32_0 = arith.constant 0 : i32
    %c0_i32_1 = arith.constant 0 : i32
    return %c0_i32, %c0_i32_0 : i32, i32
  }
  func.func @transform_7(%arg0: i32) -> (i32, i32) {
    %c0_i32 = arith.constant 0 : i32
    %c0_i32_0 = arith.constant 0 : i32
    %c0_i32_1 = arith.constant 0 : i32
    return %c0_i32, %c0_i32_0 : i32, i32
  }
  func.func @transform_8(%arg0: i32) -> (i32, i32) {
    %c0_i32 = arith.constant 0 : i32
    %c0_i32_0 = arith.constant 0 : i32
    %c0_i32_1 = arith.constant 0 : i32
    return %c0_i32, %c0_i32_0 : i32, i32
  }
  func.func @transform_9(%arg0: i32) -> (i32, i32) {
    %c0_i32 = arith.constant 0 : i32
    %c0_i32_0 = arith.constant 0 : i32
    return %c0_i32, %arg0 : i32, i32
  }
}

</mosaic_0001>

<llo_original>
// kernel: tpu_custom_call.1
$region0: #{tpu_custom_call.1}
  #allocation0 [shape = 'u32[]', space=smem, size = 0x4, offset = 0x4, fixed_abs, tag = 'smem constant byte address 0x4 - core index']
  #allocation1 [shape = 'u32[144,128]{1,0:T(1,128)}', space=vmem, size = 0x12000, scoped, tag = 'internal scratch']
  #allocation2 [shape = 'f32[1,1]{1,0:T(1,128)S(1)}', space=vmem, size = 0x200, scoped, tag = 'scoped memory for tpu_custom_call.1']
  %s0 = inlined_call_operand.vmem [shape: bf16[16,512], index: 0, kind: input, shape index: {}]
  %s1 = inlined_call_operand.vmem [shape: bf16[32,16], index: 1, kind: input, shape index: {}]
  %s2 = inlined_call_operand.vmem [shape: f32[32,1], index: 2, kind: input, shape index: {}]
  %s3 = inlined_call_operand.vmem [shape: bf16[32,32], index: 3, kind: input, shape index: {}]
  %s4 = inlined_call_operand.vmem [shape: f32[32,1], index: 4, kind: input, shape index: {}]
  %s5 = inlined_call_operand.vmem [shape: bf16[32,32], index: 5, kind: input, shape index: {}]
  %s6 = inlined_call_operand.vmem [shape: f32[32,1], index: 6, kind: input, shape index: {}]
  %s7 = inlined_call_operand.vmem [shape: f32[32,1], index: 7, kind: input, shape index: {}]
  %s8 = inlined_call_operand.<no memory space> [shape: f32[1,1], index: 8, kind: input, shape index: {}]
  %s9 = inlined_call_operand.hbm [shape: f32[1,512], index: 9, kind: output, shape index: {}]
  %s10 = sld [smem:[#allocation0]]
  $region107: #{tpu_custom_call.1} parent=0
    _
  %s12 = ssub.s32 1, %s10
  %s13 = scalar_select 0, %s12, %s10
  %v14 = vstv %s8
  %15 = vst [vmem:[#allocation2] sm:$0x1] %v14
  $region1: #{tpu_custom_call.1} parent=0
    #allocation3 [shape = 'u8[16384]{0}', space=vmem, size = 0x4000, scoped, tag = 'input window, operand 0']
    #allocation4 [shape = 'u8[2048]{0}', space=vmem, size = 0x800, scoped, tag = 'output window, operand 0']
    #allocation5 [shape = 's32[2]{0}', space=sflag, size = 0x8, scoped, tag = 'scoped memory for tpu_custom_call.1']
    %16 = vsyncpa [#allocation5], 0
    %s17 = scalar_lea.sflag [#allocation5], 1
    %18 = vsyncpa %s17, 0
    loop: start=0, step=1, limit=4
    $region2: #{tpu_custom_call.1} parent=1 // loop_pre_header
      _
    $region3: #{tpu_custom_call.1} parent=1 // loop_header
      %s20 = sphi 0, %s24
      %p21 = scmp.ge.s32.totalorder %s20, 4
      %s30 = sphi 0, %s32
      %s33 = sphi 0, %s30
      %s34 = sphi 0, %s33
      %s50 = sphi 0, %s34
      %s54 = sphi 0, %s54
      %s56 = sphi 0, %s54
      %s57 = sphi 0, %s56
      %s71 = sphi 0, %s57
      %s75 = sphi 0, %s75
      %s77 = sphi 0, %s75
      %s78 = sphi 0, %s77
      %s92 = sphi 0, %s78
      %s96 = sphi 0, %s96
      %s98 = sphi 0, %s96
      %s99 = sphi 0, %s98
      %s113 = sphi 0, %s99
      %s117 = sphi 0, %s117
      %s119 = sphi 0, %s117
      %s120 = sphi 0, %s119
      %s134 = sphi 0, %s120
      %s138 = sphi 0, %s138
      %s140 = sphi 0, %s138
      %s141 = sphi 0, %s140
      %s155 = sphi 0, %s141
      %s159 = sphi 0, %s159
      %s161 = sphi 0, %s159
      %s162 = sphi 0, %s161
      %s176 = sphi 0, %s162
      %s180 = sphi 0, %s180
      %s182 = sphi 0, %s180
      %s183 = sphi 0, %s182
      %s197 = sphi 0, %s183
      %s201 = sphi 0, %s201
      %s203 = sphi 0, %s201
      %s204 = sphi 0, %s203
      %s218 = sphi 0, %s204
      %s224 = sphi 0, %s226
      %s227 = sphi 0, %s224
      %s228 = sphi 0, %s227
      %s244 = sphi 0, %s228
    $region4: #{tpu_custom_call.1} parent=1 // loop_header_branch
      %23 = sbr.rel (%p21) target = $region8
    $region5: #{tpu_custom_call.1} parent=1 // loop_body
      %s25 = ssub.s32 %s20, 1
      %s26 = ssub.s32 %s20, 2
      %s27 = sadd.s32 %s20, 1
      %s28 = ssub.s32 %s20, %s27
      %p29 = scmp.eq.s32.totalorder %s28, 0
      %s31 = sadd.s32 %s30, 1
      %s32 = scalar_select %p29, %s30, %s31
      %p35 = pneg %p29
      %p36 = scmp.eq.s32.totalorder %s20, 1
      %p37 = por %p35, %p36
      %p38 = scmp.ne.s32.totalorder %s30, %s33
      %p39 = scmp.eq.s32.totalorder %s20, 0
      %p40 = por %p38, %p39
      %p41 = scmp.ne.s32.totalorder %s30, %s33
      %p42 = scmp.eq.s32.totalorder %s25, 1
      %p43 = por %p41, %p42
      %p44 = scmp.ne.s32.totalorder %s33, %s34
      %p45 = scmp.eq.s32.totalorder %s25, 0
      %p46 = por %p44, %p45
      %p47 = scmp.ne.s32.totalorder %s33, %s34
      %p48 = scmp.eq.s32.totalorder %s26, 1
      %p49 = por %p47, %p48
      %p51 = scmp.ne.s32.totalorder %s34, %s50
      %p52 = scmp.eq.s32.totalorder %s26, 0
      %p53 = por %p51, %p52
      %s55 = sadd.s32 %s54, 1
      %p58 = scmp.eq.s32.totalorder %s20, 1
      %p59 = scmp.ne.s32.totalorder %s54, %s56
      %p60 = scmp.eq.s32.totalorder %s20, 0
      %p61 = por %p59, %p60
      %p62 = scmp.ne.s32.totalorder %s54, %s56
      %p63 = scmp.eq.s32.totalorder %s25, 1
      %p64 = por %p62, %p63
      %p65 = scmp.ne.s32.totalorder %s56, %s57
      %p66 = scmp.eq.s32.totalorder %s25, 0
      %p67 = por %p65, %p66
      %p68 = scmp.ne.s32.totalorder %s56, %s57
      %p69 = scmp.eq.s32.totalorder %s26, 1
      %p70 = por %p68, %p69
      %p72 = scmp.ne.s32.totalorder %s57, %s71
      %p73 = scmp.eq.s32.totalorder %s26, 0
      %p74 = por %p72, %p73
      %s76 = sadd.s32 %s75, 1
      %p79 = scmp.eq.s32.totalorder %s20, 1
      %p80 = scmp.ne.s32.totalorder %s75, %s77
      %p81 = scmp.eq.s32.totalorder %s20, 0
      %p82 = por %p80, %p81
      %p83 = scmp.ne.s32.totalorder %s75, %s77
      %p84 = scmp.eq.s32.totalorder %s25, 1
      %p85 = por %p83, %p84
      %p86 = scmp.ne.s32.totalorder %s77, %s78
      %p87 = scmp.eq.s32.totalorder %s25, 0
      %p88 = por %p86, %p87
      %p89 = scmp.ne.s32.totalorder %s77, %s78
      %p90 = scmp.eq.s32.totalorder %s26, 1
      %p91 = por %p89, %p90
      %p93 = scmp.ne.s32.totalorder %s78, %s92
      %p94 = scmp.eq.s32.totalorder %s26, 0
      %p95 = por %p93, %p94
      %s97 = sadd.s32 %s96, 1
      %p100 = scmp.eq.s32.totalorder %s20, 1
      %p101 = scmp.ne.s32.totalorder %s96, %s98
      %p102 = scmp.eq.s32.totalorder %s20, 0
      %p103 = por %p101, %p102
      %p104 = scmp.ne.s32.totalorder %s96, %s98
      %p105 = scmp.eq.s32.totalorder %s25, 1
      %p106 = por %p104, %p105
      %p107 = scmp.ne.s32.totalorder %s98, %s99
      %p108 = scmp.eq.s32.totalorder %s25, 0
      %p109 = por %p107, %p108
      %p110 = scmp.ne.s32.totalorder %s98, %s99
      %p111 = scmp.eq.s32.totalorder %s26, 1
      %p112 = por %p110, %p111
      %p114 = scmp.ne.s32.totalorder %s99, %s113
      %p115 = scmp.eq.s32.totalorder %s26, 0
      %p116 = por %p114, %p115
      %s118 = sadd.s32 %s117, 1
      %p121 = scmp.eq.s32.totalorder %s20, 1
      %p122 = scmp.ne.s32.totalorder %s117, %s119
      %p123 = scmp.eq.s32.totalorder %s20, 0
      %p124 = por %p122, %p123
      %p125 = scmp.ne.s32.totalorder %s117, %s119
      %p126 = scmp.eq.s32.totalorder %s25, 1
      %p127 = por %p125, %p126
      %p128 = scmp.ne.s32.totalorder %s119, %s120
      %p129 = scmp.eq.s32.totalorder %s25, 0
      %p130 = por %p128, %p129
      %p131 = scmp.ne.s32.totalorder %s119, %s120
      %p132 = scmp.eq.s32.totalorder %s26, 1
      %p133 = por %p131, %p132
      %p135 = scmp.ne.s32.totalorder %s120, %s134
      %p136 = scmp.eq.s32.totalorder %s26, 0
      %p137 = por %p135, %p136
      %s139 = sadd.s32 %s138, 1
      %p142 = scmp.eq.s32.totalorder %s20, 1
      %p143 = scmp.ne.s32.totalorder %s138, %s140
      %p144 = scmp.eq.s32.totalorder %s20, 0
      %p145 = por %p143, %p144
      %p146 = scmp.ne.s32.totalorder %s138, %s140
      %p147 = scmp.eq.s32.totalorder %s25, 1
      %p148 = por %p146, %p147
      %p149 = scmp.ne.s32.totalorder %s140, %s141
      %p150 = scmp.eq.s32.totalorder %s25, 0
      %p151 = por %p149, %p150
      %p152 = scmp.ne.s32.totalorder %s140, %s141
      %p153 = scmp.eq.s32.totalorder %s26, 1
      %p154 = por %p152, %p153
      %p156 = scmp.ne.s32.totalorder %s141, %s155
      %p157 = scmp.eq.s32.totalorder %s26, 0
      %p158 = por %p156, %p157
      %s160 = sadd.s32 %s159, 1
      %p163 = scmp.eq.s32.totalorder %s20, 1
      %p164 = scmp.ne.s32.totalorder %s159, %s161
      %p165 = scmp.eq.s32.totalorder %s20, 0
      %p166 = por %p164, %p165
      %p167 = scmp.ne.s32.totalorder %s159, %s161
      %p168 = scmp.eq.s32.totalorder %s25, 1
      %p169 = por %p167, %p168
      %p170 = scmp.ne.s32.totalorder %s161, %s162
      %p171 = scmp.eq.s32.totalorder %s25, 0
      %p172 = por %p170, %p171
      %p173 = scmp.ne.s32.totalorder %s161, %s162
      %p174 = scmp.eq.s32.totalorder %s26, 1
      %p175 = por %p173, %p174
      %p177 = scmp.ne.s32.totalorder %s162, %s176
      %p178 = scmp.eq.s32.totalorder %s26, 0
      %p179 = por %p177, %p178
      %s181 = sadd.s32 %s180, 1
      %p184 = scmp.eq.s32.totalorder %s20, 1
      %p185 = scmp.ne.s32.totalorder %s180, %s182
      %p186 = scmp.eq.s32.totalorder %s20, 0
      %p187 = por %p185, %p186
      %p188 = scmp.ne.s32.totalorder %s180, %s182
      %p189 = scmp.eq.s32.totalorder %s25, 1
      %p190 = por %p188, %p189
      %p191 = scmp.ne.s32.totalorder %s182, %s183
      %p192 = scmp.eq.s32.totalorder %s25, 0
      %p193 = por %p191, %p192
      %p194 = scmp.ne.s32.totalorder %s182, %s183
      %p195 = scmp.eq.s32.totalorder %s26, 1
      %p196 = por %p194, %p195
      %p198 = scmp.ne.s32.totalorder %s183, %s197
      %p199 = scmp.eq.s32.totalorder %s26, 0
      %p200 = por %p198, %p199
      %s202 = sadd.s32 %s201, 1
      %p205 = scmp.eq.s32.totalorder %s20, 1
      %p206 = scmp.ne.s32.totalorder %s201, %s203
      %p207 = scmp.eq.s32.totalorder %s20, 0
      %p208 = por %p206, %p207
      %p209 = scmp.ne.s32.totalorder %s201, %s203
      %p210 = scmp.eq.s32.totalorder %s25, 1
      %p211 = por %p209, %p210
      %p212 = scmp.ne.s32.totalorder %s203, %s204
      %p213 = scmp.eq.s32.totalorder %s25, 0
      %p214 = por %p212, %p213
      %p215 = scmp.ne.s32.totalorder %s203, %s204
      %p216 = scmp.eq.s32.totalorder %s26, 1
      %p217 = por %p215, %p216
      %p219 = scmp.ne.s32.totalorder %s204, %s218
      %p220 = scmp.eq.s32.totalorder %s26, 0
      %p221 = por %p219, %p220
      %s222 = ssub.s32 %s20, %s27
      %p223 = scmp.eq.s32.totalorder %s222, 0
      %s225 = sadd.s32 %s224, 1
      %s226 = scalar_select %p223, %s224, %s225
      %p229 = pneg %p223
      %p230 = scmp.eq.s32.totalorder %s20, 1
      %p231 = por %p229, %p230
      %p232 = scmp.ne.s32.totalorder %s224, %s227
      %p233 = scmp.eq.s32.totalorder %s20, 0
      %p234 = por %p232, %p233
      %p235 = scmp.ne.s32.totalorder %s224, %s227
      %p236 = scmp.eq.s32.totalorder %s25, 1
      %p237 = por %p235, %p236
      %p238 = scmp.ne.s32.totalorder %s227, %s228
      %p239 = scmp.eq.s32.totalorder %s25, 0
      %p240 = por %p238, %p239
      %p241 = scmp.ne.s32.totalorder %s227, %s228
      %p242 = scmp.eq.s32.totalorder %s26, 1
      %p243 = por %p241, %p242
      %p245 = scmp.ne.s32.totalorder %s228, %s244
      %p246 = scmp.eq.s32.totalorder %s26, 0
      %p247 = por %p245, %p246
      %p248 = scmp.le.s32.totalorder 1, %s20
      %p249 = scmp.lt.s32.totalorder %s20, 3
      %p250 = pnand %p248, %p249
      %p251 = pneg %p250
      // Predicated region
      $region9: #{tpu_custom_call.1} parent=5 // pred_check
        _
      $region10: #{tpu_custom_call.1} parent=5 // pred_check_branch
        %253 = sbr.rel (%p250) target = $region12
      $region11: #{tpu_custom_call.1} parent=5 // pred_region
        %s254 = ssub.s32 %s20, 1
        // Predicated region
        $region13: #{tpu_custom_call.1} parent=11 // pred_check
          %p255 = pneg %p67
        $region14: #{tpu_custom_call.1} parent=11 // pred_check_branch
          %257 = sbr.rel (%p255) target = $region16
        $region15: #{tpu_custom_call.1} parent=11 // pred_region
          _
        $region16: #{tpu_custom_call.1} parent=11 // pred_fallthru
          _
        // Predicated region
        $region17: #{tpu_custom_call.1} parent=11 // pred_check
          %p258 = pneg %p88
        $region18: #{tpu_custom_call.1} parent=11 // pred_check_branch
          %260 = sbr.rel (%p258) target = $region20
        $region19: #{tpu_custom_call.1} parent=11 // pred_region
          _
        $region20: #{tpu_custom_call.1} parent=11 // pred_fallthru
          _
        // Predicated region
        $region21: #{tpu_custom_call.1} parent=11 // pred_check
          %p261 = pneg %p109
        $region22: #{tpu_custom_call.1} parent=11 // pred_check_branch
          %263 = sbr.rel (%p261) target = $region24
        $region23: #{tpu_custom_call.1} parent=11 // pred_region
          _
        $region24: #{tpu_custom_call.1} parent=11 // pred_fallthru
          _
        // Predicated region
        $region25: #{tpu_custom_call.1} parent=11 // pred_check
          %p264 = pneg %p130
        $region26: #{tpu_custom_call.1} parent=11 // pred_check_branch
          %266 = sbr.rel (%p264) target = $region28
        $region27: #{tpu_custom_call.1} parent=11 // pred_region
          _
        $region28: #{tpu_custom_call.1} parent=11 // pred_fallthru
          _
        // Predicated region
        $region29: #{tpu_custom_call.1} parent=11 // pred_check
          %p267 = pneg %p151
        $region30: #{tpu_custom_call.1} parent=11 // pred_check_branch
          %269 = sbr.rel (%p267) target = $region32
        $region31: #{tpu_custom_call.1} parent=11 // pred_region
          _
        $region32: #{tpu_custom_call.1} parent=11 // pred_fallthru
          _
        // Predicated region
        $region33: #{tpu_custom_call.1} parent=11 // pred_check
          %p270 = pneg %p172
        $region34: #{tpu_custom_call.1} parent=11 // pred_check_branch
          %272 = sbr.rel (%p270) target = $region36
        $region35: #{tpu_custom_call.1} parent=11 // pred_region
          _
        $region36: #{tpu_custom_call.1} parent=11 // pred_fallthru
          _
        // Predicated region
        $region37: #{tpu_custom_call.1} parent=11 // pred_check
          %p273 = pneg %p193
        $region38: #{tpu_custom_call.1} parent=11 // pred_check_branch
          %275 = sbr.rel (%p273) target = $region40
        $region39: #{tpu_custom_call.1} parent=11 // pred_region
          _
        $region40: #{tpu_custom_call.1} parent=11 // pred_fallthru
          _
        // Predicated region
        $region41: #{tpu_custom_call.1} parent=11 // pred_check
          %p276 = pneg %p214
        $region42: #{tpu_custom_call.1} parent=11 // pred_check_branch
          %278 = sbr.rel (%p276) target = $region44
        $region43: #{tpu_custom_call.1} parent=11 // pred_region
          _
        $region44: #{tpu_custom_call.1} parent=11 // pred_fallthru
          _
      $region12: #{tpu_custom_call.1} parent=5 // pred_fallthru
        _
      %p279 = scmp.lt.s32.totalorder %s20, 2
      // Predicated region
      $region45: #{tpu_custom_call.1} parent=5 // pred_check
        %p280 = pneg %p279
      $region46: #{tpu_custom_call.1} parent=5 // pred_check_branch
        %282 = sbr.rel (%p280) target = $region48
      $region47: #{tpu_custom_call.1} parent=5 // pred_region
        // Predicated region
        $region49: #{tpu_custom_call.1} parent=47 // pred_check
          %p283 = pneg %p40
        $region50: #{tpu_custom_call.1} parent=47 // pred_check_branch
          %285 = sbr.rel (%p283) target = $region52
        $region51: #{tpu_custom_call.1} parent=47 // pred_region
          %s286 = sand.u32 %s30, 1
          %s287 = sand.u32 %s30, 1
          %s288 = smul.addr %s287, 16
          %s289 = scalar_lea.vmem [#allocation3], %s288
          %s290 = smul.u32 2, %s20
          %s291 = smul.addr %s290, 4
          %s292 = scalar_lea.vmem %s0, %s291
          // Predicated region
          $region53: #{tpu_custom_call.1} parent=51 // pred_check
            _
          $region54: #{tpu_custom_call.1} parent=51 // pred_check_branch
            %294 = sbr.rel (0) target = $region56
          $region55: #{tpu_custom_call.1} parent=51 // pred_region
            // Predicated region
            $region57: #{tpu_custom_call.1} parent=55 // pred_check
              _
            $region58: #{tpu_custom_call.1} parent=55 // pred_check_branch
              %296 = sbr.rel (0) target = $region60
            $region59: #{tpu_custom_call.1} parent=55 // pred_region
              // Predicated region
              $region72: #{tpu_custom_call.1} parent=59 // pred_check
                _
              $region73: #{tpu_custom_call.1} parent=59 // pred_check_branch
                %313 = sbr.rel (0) target = $region75
              $region74: #{tpu_custom_call.1} parent=59 // pred_region
                loop: start=0, step=1, limit=1
                $region76: #{tpu_custom_call.1} parent=74 // loop_pre_header
                  _
                $region77: #{tpu_custom_call.1} parent=74 // loop_header
                  %s315 = sphi 0, %s319
                  %p316 = scmp.ge.s32.totalorder %s315, 1
                  %s320 = sphi %s292, %s292
                  %s321 = sphi %s289, %s289
                $region78: #{tpu_custom_call.1} parent=74 // loop_header_branch
                  %318 = sbr.rel (%p316) target = $region82
                $region79: #{tpu_custom_call.1} parent=74 // loop_body
                  %v322 = vld [vmem:[%s320] sm:$0xff]
                  %323 = vst [vmem:[%s321] sm:$0xff] %v322
                  %v324 = vld [vmem:[%s320 + $0x10] sm:$0xff]
                  %325 = vst [vmem:[%s321 + $0x8] sm:$0xff] %v324
                $region80: #{tpu_custom_call.1} parent=74 // loop_footer
                  %s319 = sadd.s32 1, %s315
                $region81: #{tpu_custom_call.1} parent=74 // loop_footer_branch
                  %314 = sbr.rel target = $region77
                $region82: #{tpu_custom_call.1} parent=74 // loop_exit
                  _
              $region75: #{tpu_custom_call.1} parent=59 // pred_fallthru
                _
              // Predicated region
              $region83: #{tpu_custom_call.1} parent=59 // pred_check
                _
              $region84: #{tpu_custom_call.1} parent=59 // pred_check_branch
                %327 = sbr.rel target = $region86
              $region85: #{tpu_custom_call.1} parent=59 // pred_region
                _
              $region86: #{tpu_custom_call.1} parent=59 // pred_fallthru
                _
            $region60: #{tpu_custom_call.1} parent=55 // pred_fallthru
              _
            // Predicated region
            $region61: #{tpu_custom_call.1} parent=55 // pred_check
              _
            $region62: #{tpu_custom_call.1} parent=55 // pred_check_branch
              %298 = sbr.rel target = $region64
            $region63: #{tpu_custom_call.1} parent=55 // pred_region
              loop: start=0, step=1, limit=1
              $region65: #{tpu_custom_call.1} parent=63 // loop_pre_header
                _
              $region66: #{tpu_custom_call.1} parent=63 // loop_header
                %s301 = sphi 0, %s305
                %p302 = scmp.ge.s32.totalorder %s301, 1
                %s306 = sphi %s292, %s292
                %s307 = sphi %s289, %s289
              $region67: #{tpu_custom_call.1} parent=63 // loop_header_branch
                %304 = sbr.rel (%p302) target = $region71
              $region68: #{tpu_custom_call.1} parent=63 // loop_body
                %v308 = vld [vmem:[%s306] sm:$0xff]
                %309 = vst [vmem:[%s307] sm:$0xff] %v308
                %v310 = vld [vmem:[%s306 + $0x10] sm:$0xff]
                %311 = vst [vmem:[%s307 + $0x8] sm:$0xff] %v310
              $region69: #{tpu_custom_call.1} parent=63 // loop_footer
                %s305 = sadd.s32 1, %s301
              $region70: #{tpu_custom_call.1} parent=63 // loop_footer_branch
                %300 = sbr.rel target = $region66
              $region71: #{tpu_custom_call.1} parent=63 // loop_exit
                _
            $region64: #{tpu_custom_call.1} parent=55 // pred_fallthru
              _
          $region56: #{tpu_custom_call.1} parent=51 // pred_fallthru
            _
          %328 = vnop
        $region52: #{tpu_custom_call.1} parent=47 // pred_fallthru
          _
      $region48: #{tpu_custom_call.1} parent=5 // pred_fallthru
        _
      %p329 = scmp.le.s32.totalorder 1, %s20
      %p330 = scmp.lt.s32.totalorder %s20, 3
      %p331 = pnand %p329, %p330
      %p332 = pneg %p331
      // Predicated region
      $region87: #{tpu_custom_call.1} parent=5 // pred_check
        _
      $region88: #{tpu_custom_call.1} parent=5 // pred_check_branch
        %334 = sbr.rel (%p331) target = $region90
      $region89: #{tpu_custom_call.1} parent=5 // pred_region
        %s335 = ssub.s32 %s20, 1
        %s336 = sand.u32 %s33, 1
        %s337 = sand.u32 %s33, 1
        %s338 = smul.addr %s337, 16
        %s339 = scalar_lea.vmem [#allocation3], %s338
        // Predicated region
        $region91: #{tpu_custom_call.1} parent=89 // pred_check
          %p340 = pneg %p46
        $region92: #{tpu_custom_call.1} parent=89 // pred_check_branch
          %342 = sbr.rel (%p340) target = $region94
        $region93: #{tpu_custom_call.1} parent=89 // pred_region
          _
        $region94: #{tpu_custom_call.1} parent=89 // pred_fallthru
          _
        %s343 = sand.u32 %s33, 1
        %s344 = sand.u32 %s33, 1
        %s345 = smul.addr %s344, 16
        %s346 = scalar_lea.vmem [#allocation3], %s345
        %p347 = pneg %p46
        %p348 = pneg %p43
        %p349 = pneg %p67
        %p350 = pneg %p64
        %p351 = pneg %p88
        %p352 = pneg %p85
        %p353 = pneg %p109
        %p354 = pneg %p106
        %p355 = pneg %p130
        %p356 = pneg %p127
        %p357 = pneg %p151
        %p358 = pneg %p148
        %p359 = pneg %p172
        %p360 = pneg %p169
        %p361 = pneg %p193
        %p362 = pneg %p190
        %p363 = pneg %p214
        %p364 = pneg %p211
        %p365 = pneg %p240
        %p366 = pneg %p237
        %s367 = sand.u32 %s227, 1
        %s368 = scalar_lea.sflag [#allocation5], %s367
        %s369 = sand.u32 %s227, 1
        %s370 = smul.addr %s369, 2
        %s371 = scalar_lea.vmem [#allocation4], %s370
        %s372 = smul.u32 2, %s25
        %s373 = smul.u32 2, %s25
        %v375 = vld [vmem:[%s339] sm:$0xff]
        %v376 = vld [vmem:[%s339 + $0x8] sm:$0xff]
        %v377 = vld [vmem:[%s1] sm:$0xf]
        %v378 = vld [vmem:[%s1 + $0x4] sm:$0xf]
        %v379 = vld [vmem:[%s1 + $0x8] sm:$0xf]
        %v380 = vld [vmem:[%s1 + $0xc] sm:$0xf]
        %v381 = vld [vmem:[%s2] sm:$0xff]
        %v382 = vld [vmem:[%s2 + $0x8] sm:$0xff]
        %v383 = vld [vmem:[%s2 + $0x10] sm:$0xff]
        %v384 = vld [vmem:[%s2 + $0x18] sm:$0xff]
        %386 = vset.pattern.permute.xlu0 0
        %387 = vperm.xlu0 %386, %v381
        %v388 = vpop.permute.xlu0 %387
        %391 = vset.pattern.permute.xlu0 0
        %392 = vperm.xlu0 %391, %v382
        %v393 = vpop.permute.xlu0 %392
        %396 = vset.pattern.permute.xlu0 0
        %397 = vperm.xlu0 %396, %v383
        %v398 = vpop.permute.xlu0 %397
        %401 = vset.pattern.permute.xlu0 0
        %402 = vperm.xlu0 %401, %v384
        %v403 = vpop.permute.xlu0 %402
        %v409 = vunpack.c.l.b16 %v377
        %v410 = vunpack.c.l.b16 %v378
        %v411 = vunpack.c.l.b16 %v379
        %v412 = vunpack.c.l.b16 %v380
        %v413 = vpack.c.b16 %v410, %v409
        %v414 = vpack.c.b16 %v412, %v411
        %v417 = vunpack.c.l.b16 %v375
        %v418 = vunpack.c.h.b16 %v375
        %v419 = vunpack.c.l.b16 %v376
        %v420 = vunpack.c.h.b16 %v376
        %v421 = vpack.c.b16 %v419, %v417
        %v422 = vpack.c.b16 %v420, %v418
        %vm425 = vcmask 130048
        %v427 = vsel %vm425, %v413, 0
        %v430 = vsel %vm425, %v414, 0
        %432 = vmatprep.subr.bf16.mxu0 %v422
        %433 = vmatpush1.bf16.msra.mxu0 %v421
        %434 = vmatprep.subr.bf16.mxu0 0
        %435 = vmatpush1.bf16.msra.mxu0 0
        %436 = vmatprep.subr.bf16.mxu0 0
        %437 = vmatpush1.bf16.msra.mxu0 0
        %438 = vmatprep.subr.bf16.mxu0 0
        %439 = vmatpush1.bf16.msra.mxu0 0
        %440 = vmatprep.subr.bf16.mxu0 0
        %441 = vmatpush1.bf16.msra.mxu0 0
        %442 = vmatprep.subr.bf16.mxu0 0
        %443 = vmatpush1.bf16.msra.mxu0 0
        %444 = vmatprep.subr.bf16.mxu0 0
        %445 = vmatpush1.bf16.msra.mxu0 0
        %446 = vmatprep.subr.bf16.mxu0 0
        %447 = vmatpush1.bf16.msra.mxu0 0
        %448 = vmatprep.subr.bf16.mxu0 0
        %449 = vmatpush1.bf16.msra.mxu0 0
        %450 = vmatprep.subr.bf16.mxu0 0
        %451 = vmatpush1.bf16.msra.mxu0 0
        %452 = vmatprep.subr.bf16.mxu0 0
        %453 = vmatpush1.bf16.msra.mxu0 0
        %454 = vmatprep.subr.bf16.mxu0 0
        %455 = vmatpush1.bf16.msra.mxu0 0
        %456 = vmatprep.subr.bf16.mxu0 0
        %457 = vmatpush1.bf16.msra.mxu0 0
        %458 = vmatprep.subr.bf16.mxu0 0
        %459 = vmatpush1.bf16.msra.mxu0 0
        %460 = vmatprep.subr.bf16.mxu0 0
        %461 = vmatpush1.bf16.msra.mxu0 0
        %462 = vmatprep.subr.bf16.mxu0 0
        %463 = vmatpush1.bf16.msra.mxu0 0
        %464 = vmatprep.mubr.bf16.mxu0 0
        %465 = vmatmul.mubr.bf16.gmra.mrb[0].mxu0 %v427
        %v466 = vpop.f32.mrb[0].mxu0
        %v467 = vadd.f32 %v388, %v466
        %v468 = vpop.f32.mrb[0].mxu0
        %v469 = vadd.f32 %v388, %v468
        %v470 = vpop.f32.mrb[0].mxu0
        %v471 = vadd.f32 %v393, %v470
        %v472 = vpop.f32.mrb[0].mxu0
        %v473 = vadd.f32 %v393, %v472
        %474 = vmatprep.mubr.bf16.mxu0 0
        %475 = vmatmul.mubr.bf16.gmra.mrb[0].mxu0 %v430
        %v476 = vpop.f32.mrb[0].mxu0
        %v477 = vadd.f32 %v398, %v476
        %v478 = vpop.f32.mrb[0].mxu0
        %v479 = vadd.f32 %v398, %v478
        %v480 = vpop.f32.mrb[0].mxu0
        %v481 = vadd.f32 %v403, %v480
        %v482 = vpop.f32.mrb[0].mxu0
        %v483 = vadd.f32 %v403, %v482
        %484 = vdwg.mxu0
        %v485 = vmax.f32 %v467, 0.0
        %v486 = vmax.f32 %v469, 0.0
        %v487 = vmax.f32 %v471, 0.0
        %v488 = vmax.f32 %v473, 0.0
        %v489 = vmax.f32 %v477, 0.0
        %v490 = vmax.f32 %v479, 0.0
        %v491 = vmax.f32 %v481, 0.0
        %v492 = vmax.f32 %v483, 0.0
        %v493 = vld [vmem:[%s3] sm:$0xf]
        %v494 = vld [vmem:[%s3 + $0x4] sm:$0xf]
        %v495 = vld [vmem:[%s3 + $0x8] sm:$0xf]
        %v496 = vld [vmem:[%s3 + $0xc] sm:$0xf]
        %v497 = vpack.c.bf16 %v487, %v485
        %v498 = vpack.c.bf16 %v488, %v486
        %v499 = vpack.c.bf16 %v491, %v489
        %v500 = vpack.c.bf16 %v492, %v490
        %v501 = vld [vmem:[%s4] sm:$0xff]
        %v502 = vld [vmem:[%s4 + $0x8] sm:$0xff]
        %v503 = vld [vmem:[%s4 + $0x10] sm:$0xff]
        %v504 = vld [vmem:[%s4 + $0x18] sm:$0xff]
        %506 = vset.pattern.permute.xlu0 0
        %507 = vperm.xlu0 %506, %v501
        %v508 = vpop.permute.xlu0 %507
        %511 = vset.pattern.permute.xlu0 0
        %512 = vperm.xlu0 %511, %v502
        %v513 = vpop.permute.xlu0 %512
        %516 = vset.pattern.permute.xlu0 0
        %517 = vperm.xlu0 %516, %v503
        %v518 = vpop.permute.xlu0 %517
        %521 = vset.pattern.permute.xlu0 0
        %522 = vperm.xlu0 %521, %v504
        %v523 = vpop.permute.xlu0 %522
        %v529 = vunpack.c.l.b16 %v493
        %v530 = vunpack.c.l.b16 %v494
        %v531 = vunpack.c.l.b16 %v495
        %v532 = vunpack.c.l.b16 %v496
        %v533 = vpack.c.b16 %v530, %v529
        %v534 = vpack.c.b16 %v532, %v531
        %vm535 = vcmask 261120
        %v537 = vsel %vm535, %v533, 0
        %v540 = vsel %vm535, %v534, 0
        %542 = vmatprep.subr.bf16.mxu0 %v498
        %543 = vmatpush1.bf16.msra.mxu0 %v497
        %544 = vmatprep.subr.bf16.mxu0 %v500
        %545 = vmatpush1.bf16.msra.mxu0 %v499
        %546 = vmatprep.subr.bf16.mxu0 0
        %547 = vmatpush1.bf16.msra.mxu0 0
        %548 = vmatprep.subr.bf16.mxu0 0
        %549 = vmatpush1.bf16.msra.mxu0 0
        %550 = vmatprep.subr.bf16.mxu0 0
        %551 = vmatpush1.bf16.msra.mxu0 0
        %552 = vmatprep.subr.bf16.mxu0 0
        %553 = vmatpush1.bf16.msra.mxu0 0
        %554 = vmatprep.subr.bf16.mxu0 0
        %555 = vmatpush1.bf16.msra.mxu0 0
        %556 = vmatprep.subr.bf16.mxu0 0
        %557 = vmatpush1.bf16.msra.mxu0 0
        %558 = vmatprep.subr.bf16.mxu0 0
        %559 = vmatpush1.bf16.msra.mxu0 0
        %560 = vmatprep.subr.bf16.mxu0 0
        %561 = vmatpush1.bf16.msra.mxu0 0
        %562 = vmatprep.subr.bf16.mxu0 0
        %563 = vmatpush1.bf16.msra.mxu0 0
        %564 = vmatprep.subr.bf16.mxu0 0
        %565 = vmatpush1.bf16.msra.mxu0 0
        %566 = vmatprep.subr.bf16.mxu0 0
        %567 = vmatpush1.bf16.msra.mxu0 0
        %568 = vmatprep.subr.bf16.mxu0 0
        %569 = vmatpush1.bf16.msra.mxu0 0
        %570 = vmatprep.subr.bf16.mxu0 0
        %571 = vmatpush1.bf16.msra.mxu0 0
        %572 = vmatprep.subr.bf16.mxu0 0
        %573 = vmatpush1.bf16.msra.mxu0 0
        %574 = vmatprep.mubr.bf16.mxu0 0
        %575 = vmatmul.mubr.bf16.gmra.mrb[0].mxu0 %v537
        %v576 = vpop.f32.mrb[0].mxu0
        %v577 = vadd.f32 %v508, %v576
        %v578 = vpop.f32.mrb[0].mxu0
        %v579 = vadd.f32 %v508, %v578
        %v580 = vpop.f32.mrb[0].mxu0
        %v581 = vadd.f32 %v513, %v580
        %v582 = vpop.f32.mrb[0].mxu0
        %v583 = vadd.f32 %v513, %v582
        %584 = vmatprep.mubr.bf16.mxu0 0
        %585 = vmatmul.mubr.bf16.gmra.mrb[0].mxu0 %v540
        %v586 = vpop.f32.mrb[0].mxu0
        %v587 = vadd.f32 %v518, %v586
        %v588 = vpop.f32.mrb[0].mxu0
        %v589 = vadd.f32 %v518, %v588
        %v590 = vpop.f32.mrb[0].mxu0
        %v591 = vadd.f32 %v523, %v590
        %v592 = vpop.f32.mrb[0].mxu0
        %v593 = vadd.f32 %v523, %v592
        %594 = vdwg.mxu0
        %v595 = vmax.f32 %v577, 0.0
        %v596 = vmax.f32 %v579, 0.0
        %v597 = vmax.f32 %v581, 0.0
        %v598 = vmax.f32 %v583, 0.0
        %v599 = vmax.f32 %v587, 0.0
        %v600 = vmax.f32 %v589, 0.0
        %v601 = vmax.f32 %v591, 0.0
        %v602 = vmax.f32 %v593, 0.0
        %v603 = vld [vmem:[%s5] sm:$0xf]
        %v604 = vld [vmem:[%s5 + $0x4] sm:$0xf]
        %v605 = vld [vmem:[%s5 + $0x8] sm:$0xf]
        %v606 = vld [vmem:[%s5 + $0xc] sm:$0xf]
        %v607 = vpack.c.bf16 %v597, %v595
        %v608 = vpack.c.bf16 %v598, %v596
        %v609 = vpack.c.bf16 %v601, %v599
        %v610 = vpack.c.bf16 %v602, %v600
        %v611 = vld [vmem:[%s6] sm:$0xff]
        %v612 = vld [vmem:[%s6 + $0x8] sm:$0xff]
        %v613 = vld [vmem:[%s6 + $0x10] sm:$0xff]
        %v614 = vld [vmem:[%s6 + $0x18] sm:$0xff]
        %616 = vset.pattern.permute.xlu0 0
        %617 = vperm.xlu0 %616, %v611
        %v618 = vpop.permute.xlu0 %617
        %621 = vset.pattern.permute.xlu0 0
        %622 = vperm.xlu0 %621, %v612
        %v623 = vpop.permute.xlu0 %622
        %626 = vset.pattern.permute.xlu0 0
        %627 = vperm.xlu0 %626, %v613
        %v628 = vpop.permute.xlu0 %627
        %631 = vset.pattern.permute.xlu0 0
        %632 = vperm.xlu0 %631, %v614
        %v633 = vpop.permute.xlu0 %632
        %v639 = vunpack.c.l.b16 %v603
        %v640 = vunpack.c.l.b16 %v604
        %v641 = vunpack.c.l.b16 %v605
        %v642 = vunpack.c.l.b16 %v606
        %v643 = vpack.c.b16 %v640, %v639
        %v644 = vpack.c.b16 %v642, %v641
        %v646 = vsel %vm535, %v643, 0
        %v649 = vsel %vm535, %v644, 0
        %651 = vmatprep.subr.bf16.mxu0 %v608
        %652 = vmatpush1.bf16.msra.mxu0 %v607
        %653 = vmatprep.subr.bf16.mxu0 %v610
        %654 = vmatpush1.bf16.msra.mxu0 %v609
        %655 = vmatprep.subr.bf16.mxu0 0
        %656 = vmatpush1.bf16.msra.mxu0 0
        %657 = vmatprep.subr.bf16.mxu0 0
        %658 = vmatpush1.bf16.msra.mxu0 0
        %659 = vmatprep.subr.bf16.mxu0 0
        %660 = vmatpush1.bf16.msra.mxu0 0
        %661 = vmatprep.subr.bf16.mxu0 0
        %662 = vmatpush1.bf16.msra.mxu0 0
        %663 = vmatprep.subr.bf16.mxu0 0
        %664 = vmatpush1.bf16.msra.mxu0 0
        %665 = vmatprep.subr.bf16.mxu0 0
        %666 = vmatpush1.bf16.msra.mxu0 0
        %667 = vmatprep.subr.bf16.mxu0 0
        %668 = vmatpush1.bf16.msra.mxu0 0
        %669 = vmatprep.subr.bf16.mxu0 0
        %670 = vmatpush1.bf16.msra.mxu0 0
        %671 = vmatprep.subr.bf16.mxu0 0
        %672 = vmatpush1.bf16.msra.mxu0 0
        %673 = vmatprep.subr.bf16.mxu0 0
        %674 = vmatpush1.bf16.msra.mxu0 0
        %675 = vmatprep.subr.bf16.mxu0 0
        %676 = vmatpush1.bf16.msra.mxu0 0
        %677 = vmatprep.subr.bf16.mxu0 0
        %678 = vmatpush1.bf16.msra.mxu0 0
        %679 = vmatprep.subr.bf16.mxu0 0
        %680 = vmatpush1.bf16.msra.mxu0 0
        %681 = vmatprep.subr.bf16.mxu0 0
        %682 = vmatpush1.bf16.msra.mxu0 0
        %683 = vmatprep.mubr.bf16.mxu0 0
        %684 = vmatmul.mubr.bf16.gmra.mrb[0].mxu0 %v646
        %v685 = vpop.f32.mrb[0].mxu0
        %v686 = vadd.f32 %v618, %v685
        %v687 = vpop.f32.mrb[0].mxu0
        %v688 = vadd.f32 %v618, %v687
        %v689 = vpop.f32.mrb[0].mxu0
        %v690 = vadd.f32 %v623, %v689
        %v691 = vpop.f32.mrb[0].mxu0
        %v692 = vadd.f32 %v623, %v691
        %693 = vmatprep.mubr.bf16.mxu0 0
        %694 = vmatmul.mubr.bf16.gmra.mrb[0].mxu0 %v649
        %v695 = vpop.f32.mrb[0].mxu0
        %v696 = vadd.f32 %v628, %v695
        %v697 = vpop.f32.mrb[0].mxu0
        %v698 = vadd.f32 %v628, %v697
        %v699 = vpop.f32.mrb[0].mxu0
        %v700 = vadd.f32 %v633, %v699
        %v701 = vpop.f32.mrb[0].mxu0
        %v702 = vadd.f32 %v633, %v701
        %703 = vdwg.mxu0
        %v704 = vmax.f32 %v686, 0.0
        %v705 = vmax.f32 %v688, 0.0
        %v706 = vmax.f32 %v690, 0.0
        %v707 = vmax.f32 %v692, 0.0
        %v708 = vmax.f32 %v696, 0.0
        %v709 = vmax.f32 %v698, 0.0
        %v710 = vmax.f32 %v700, 0.0
        %v711 = vmax.f32 %v702, 0.0
        %v712 = vld [vmem:[%s7] sm:$0xff]
        %v713 = vld [vmem:[%s7 + $0x8] sm:$0xff]
        %v714 = vld [vmem:[%s7 + $0x10] sm:$0xff]
        %v715 = vld [vmem:[%s7 + $0x18] sm:$0xff]
        %717 = vset.pattern.permute.xlu0 0
        %718 = vperm.xlu0 %717, %v712
        %v719 = vpop.permute.xlu0 %718
        %722 = vset.pattern.permute.xlu0 0
        %723 = vperm.xlu0 %722, %v713
        %v724 = vpop.permute.xlu0 %723
        %727 = vset.pattern.permute.xlu0 0
        %728 = vperm.xlu0 %727, %v714
        %v729 = vpop.permute.xlu0 %728
        %732 = vset.pattern.permute.xlu0 0
        %733 = vperm.xlu0 %732, %v715
        %v734 = vpop.permute.xlu0 %733
        %v736 = vmul.f32 %v704, %v719
        %v737 = vmul.f32 %v705, %v719
        %v738 = vmul.f32 %v706, %v724
        %v739 = vmul.f32 %v707, %v724
        %v740 = vmul.f32 %v708, %v729
        %v741 = vmul.f32 %v709, %v729
        %v742 = vmul.f32 %v710, %v734
        %v743 = vmul.f32 %v711, %v734
        %v744 = vadd.f32 %v736, %v738
        %v745 = vadd.f32 %v744, %v740
        %v746 = vadd.f32 %v745, %v742
        %v747 = vrot.slane %v746, 4
        %v748 = vadd.f32 %v746, %v747
        %v749 = vrot.slane %v748, 2
        %v750 = vadd.f32 %v748, %v749
        %v751 = vrot.slane %v750, 1
        %v752 = vadd.f32 %v750, %v751
        %v753 = vadd.f32 %v737, %v739
        %v754 = vadd.f32 %v753, %v741
        %v755 = vadd.f32 %v754, %v743
        %v756 = vrot.slane %v755, 4
        %v757 = vadd.f32 %v755, %v756
        %v758 = vrot.slane %v757, 2
        %v759 = vadd.f32 %v757, %v758
        %v760 = vrot.slane %v759, 1
        %v761 = vadd.f32 %v759, %v760
        %v762 = vld [vmem:[#allocation2] sm:$0x1]
        %764 = vset.pattern.permute.xlu0 0
        %765 = vperm.xlu0 %764, %v762
        %v766 = vpop.permute.xlu0 %765
        %v768 = vlaneseq
        %v769 = vshrl.u32 %v768, 7
        %v770 = vsub.s32 0, %v769
        %v771 = vrot.slane %v766, %v770
        %v772 = vadd.f32 %v752, %v771
        %v773 = vadd.f32 %v761, %v771
        %v776 = vcombine.low %v772, %v773
        %v778 = vunpack.c.l.s4 1966171168
        %v779 = vunpack.c.0.s8 %v778
        %v780 = vlaneseq
        %v781 = vshrl.u32 %v780, 7
        %v782 = vsub.s32 %v779, %v781
        %v783 = vrot.slane %v776, %v782
        %v785 = vunpack.c.l.s4 1966171168
        %v786 = vunpack.c.0.s8 %v785
        %v787 = vlaneseq
        %v788 = vshrl.u32 %v787, 7
        %v789 = vsub.s32 %v786, %v788
        %v790 = vrot.slane %v783, %v789
        %v792 = vlaneseq
        %vm793 = vcmp.ge.s32.totalorder %v792, 0
        %vm794 = vcmp.lt.s32.totalorder %v792, 256
        %vm795 = vmand %vm793, %vm794
        %796 = vst.msk [vmem:[%s371] sm:$0x3] %vm795, %v790
        %s797 = sand.u32 %s227, 1
        %s798 = scalar_lea.sflag [#allocation5], %s797
        %s799 = sand.u32 %s227, 1
        %s800 = smul.addr %s799, 2
        %s801 = scalar_lea.vmem [#allocation4], %s800
        // Predicated region
        $region95: #{tpu_custom_call.1} parent=89 // pred_check
          %p802 = pneg %p237
        $region96: #{tpu_custom_call.1} parent=89 // pred_check_branch
          %804 = sbr.rel (%p802) target = $region98
        $region97: #{tpu_custom_call.1} parent=89 // pred_region
          %s805 = smul.u32 2, %s25
          %s807 = ssub.s32 32, 32
          %808 = vsyncadd %s798, %s807
          %s809 = smul.addr %s805, 16
          %s810 = scalar_lea.hbm %s9, %s809
          %s812 = sshll.u32 %s801, 4
          %s813 = int_to_ptr.vmem [resolvable:$true] %s812
          %815 = dma.vmem_to_hbm [thread:$0]  %s813, 32, %s810, %s798
        $region98: #{tpu_custom_call.1} parent=89 // pred_fallthru
          _
      $region90: #{tpu_custom_call.1} parent=5 // pred_fallthru
        _
      %p816 = scmp.le.s32.totalorder 2, %s20
      // Predicated region
      $region99: #{tpu_custom_call.1} parent=5 // pred_check
        %p817 = pneg %p816
      $region100: #{tpu_custom_call.1} parent=5 // pred_check_branch
        %819 = sbr.rel (%p817) target = $region102
      $region101: #{tpu_custom_call.1} parent=5 // pred_region
        %s820 = ssub.s32 %s20, 2
        // Predicated region
        $region103: #{tpu_custom_call.1} parent=101 // pred_check
          %p821 = pneg %p243
        $region104: #{tpu_custom_call.1} parent=101 // pred_check_branch
          %823 = sbr.rel (%p821) target = $region106
        $region105: #{tpu_custom_call.1} parent=101 // pred_region
          %s824 = sand.u32 %s228, 1
          %s825 = scalar_lea.sflag [#allocation5], %s824
          %s826 = sand.u32 %s228, 1
          %s827 = smul.addr %s826, 2
          %s828 = scalar_lea.vmem [#allocation4], %s827
          %829 = dma.done %s825, 32
        $region106: #{tpu_custom_call.1} parent=101 // pred_fallthru
          _
      $region102: #{tpu_custom_call.1} parent=5 // pred_fallthru
        _
    $region6: #{tpu_custom_call.1} parent=1 // loop_footer
      %s24 = sadd.s32 1, %s20
    $region7: #{tpu_custom_call.1} parent=1 // loop_footer_branch
      %19 = sbr.rel target = $region3
    $region8: #{tpu_custom_call.1} parent=1 // loop_exit
      _
    %830 = vsyncpa [#allocation5], 1
    %s831 = scalar_lea.sflag [#allocation5], 1
    %832 = vsyncpa %s831, 1

</llo_original>
